<compile_context>
chip_gen: v7x
topology: tpu7x:2x2x1
jax: 0.10.0
libtpu: 0.0.40
codegen_flags: <defaults>
</compile_context>

<pallas_src>
import functools

import jax
import jax.numpy as jnp
from jax import lax
from jax.experimental import pallas as pl
from jax.experimental.pallas import tpu as pltpu

NEG_SLOPE = 0.2
K_PAD = 48  # 9 taps * C(4) + shortcut C(4) + bias(1) = 41, padded to 48 (sublane multiple)


def _lrelu(x):
    # LeakyReLU(0.2): max(x, 0.2*x) -- 2 VALU ops instead of cmp+mul+select.
    return jnp.maximum(x, NEG_SLOPE * x)


def _res_block_kernel(x_ref, w0_ref, w1_ref, out_ref, *, img_w):
    """Fused ActFirstResBlock for one image.

    x_ref  : (CIN, H*W)  one image; channels on sublanes, pixels lane-dense.
    w0_ref : (FHID, 48)  [conv_0 taps | zeros (shortcut slot) | b0 | zero pad]
    w1_ref : (FOUT, 48)  [conv_1 taps | ws^T                  | b1 | zero pad]
    out_ref: (FOUT, H*W)
    """
    cin, hw = x_ref.shape
    x = x_ref[...].astype(jnp.float32)

    # Boundary masks over the flat pixel (lane) axis -> ReflectionPad2d(1) without a padded tensor.
    lane = lax.broadcasted_iota(jnp.int32, (1, hw), 1)
    if (img_w & (img_w - 1)) == 0:
        col = lane & (img_w - 1)
    else:  # not hit in this config (W=16)
        col = lane % img_w
    top = lane < img_w               # h == 0
    bottom = lane >= hw - img_w      # h == H-1
    left = col == 0                  # w == 0
    right = col == img_w - 1         # w == W-1

    def roll(a, s):
        # out[..., p] = a[..., (p - s) % hw]  (jnp.roll semantics; XLU lane rotate)
        return pltpu.roll(a, s % hw, axis=1)

    def taps(a):
        # 9 reflect-padded 3x3 tap views of the activated map `a` (C, H*W). The wrapped lanes of
        # each rotation land exactly on masked boundary positions and are repaired by the selects.
        up = roll(a, -img_w)          # source row h+1
        dn = roll(a, img_w)           # source row h-1
        rows = (jnp.where(top, up, dn),        # ky=0 (dy=-1): reflect at h==0
                a,                             # ky=1 (dy= 0)
                jnp.where(bottom, dn, up))     # ky=2 (dy=+1): reflect at h==H-1
        views = []
        for r in rows:
            cm = roll(r, 1)           # source col w-1
            cp = roll(r, -1)          # source col w+1
            views += [jnp.where(left, cp, cm),   # kx=0 (dx=-1): reflect at w==0
                      r,                         # kx=1 (dx= 0)
                      jnp.where(right, cm, cp)]  # kx=2 (dx=+1): reflect at w==W-1
        return views

    # Constant patch tail, shared by both convs:
    #   rows [36,40): raw x (fused learned 1x1 shortcut), row 40: ones (bias), rows [41,48): zeros.
    tail = [x,
            jnp.ones((1, hw), jnp.float32),
            jnp.zeros((K_PAD - 10 * cin - 1, hw), jnp.float32)]

    def conv(act, w_ref):
        # One im2col matmul on the MXU: (O, 48) x (48, H*W) -> (O, H*W), f32 accumulation.
        patch = jnp.concatenate(taps(act) + tail, axis=0)         # (48, H*W), register value
        return lax.dot_general(w_ref[...], patch, (((1,), (0,)), ((), ())),
                               preferred_element_type=jnp.float32)

    h0 = conv(_lrelu(x), w0_ref)      # conv_0 (+b0); shortcut rows hit zero weight columns
    out = conv(_lrelu(h0), w1_ref)    # conv_1 (+b1) with the learned 1x1 shortcut of raw x fused in
    out_ref[...] = out.astype(out_ref.dtype)


@jax.jit
def act_first_res_block(x_nchw, w0, b0, w1, b1, ws):
    """ActFirstResBlock forward.

    x_nchw: (N, FIN, H, W) f32 (PyTorch NCHW).
    w0: (3,3,FIN,FHID) HWIO, b0: (FHID,), w1: (3,3,FHID,FOUT), b1: (FOUT,),
    ws: (FIN, FOUT) learned 1x1 shortcut (no bias).  Returns (N, FOUT, H, W).
    """
    n, fin, h, w = x_nchw.shape
    fhid = w0.shape[-1]
    fout = ws.shape[-1]
    assert fhid == fin, "kernel assumes fhid == fin (true for fhid=min(fin,fout), fin<=fout)"
    hw = h * w
    assert hw % 128 == 0 and 10 * fin + 1 <= K_PAD

    # Fold bias and the 1x1 shortcut into flattened im2col weights; pad K to 48 (tiny, trace-time).
    # Column layout matches the in-kernel patch rows: [36 taps | FIN shortcut | bias | zero pad].
    w0_flat = jnp.transpose(w0, (3, 0, 1, 2)).reshape(fhid, 9 * fin)
    w1_flat = jnp.transpose(w1, (3, 0, 1, 2)).reshape(fout, 9 * fhid)
    pad_cols = K_PAD - 10 * fin - 1
    w0a = jnp.concatenate([w0_flat, jnp.zeros((fhid, fin), jnp.float32),
                           b0[:, None], jnp.zeros((fhid, pad_cols), jnp.float32)], axis=1)
    w1a = jnp.concatenate([w1_flat, ws.T,
                           b1[:, None], jnp.zeros((fout, pad_cols), jnp.float32)], axis=1)

    # Lane-dense layout (C, N*H*W); tiny (8/16 KB) wrapper-side transposes.
    x_flat = jnp.transpose(x_nchw, (1, 0, 2, 3)).reshape(fin, n * hw)

    kernel = functools.partial(_res_block_kernel, img_w=w)
    out = pl.pallas_call(
        kernel,
        out_shape=jax.ShapeDtypeStruct((fout, n * hw), jnp.float32),
        grid=(n,),
        in_specs=[pl.BlockSpec((fin, hw), lambda i: (0, i)),      # one image per program
                  pl.BlockSpec((fhid, K_PAD), lambda i: (0, 0)),  # weights resident across grid
                  pl.BlockSpec((fout, K_PAD), lambda i: (0, 0))],
        out_specs=pl.BlockSpec((fout, hw), lambda i: (0, i)),
        compiler_params=pltpu.CompilerParams(dimension_semantics=("parallel",)),
    )(x_flat, w0a, w1a)

    # (FOUT, N*H*W) -> (N, FOUT, H, W)
    return jnp.transpose(out.reshape(fout, n, h, w), (1, 0, 2, 3))


def _reference(x_nchw, w0, b0, w1, b1, ws):
    """Pure-JAX reference (NHWC, lax.conv) for validation."""
    x = jnp.transpose(x_nchw, (0, 2, 3, 1))
    dn = jax.lax.conv_dimension_numbers(x.shape, w0.shape, ("NHWC", "HWIO", "NHWC"))

    x_s = jax.lax.conv_general_dilated(
        x, ws.reshape(1, 1, *ws.shape), (1, 1), "VALID", dimension_numbers=dn)

    def block(a, wgt, bias):
        a = jnp.where(a >= 0, a, NEG_SLOPE * a)
        a = jnp.pad(a, ((0, 0), (1, 1), (1, 1), (0, 0)), mode="reflect")
        a = jax.lax.conv_general_dilated(a, wgt, (1, 1), "VALID", dimension_numbers=dn)
        return a + bias.reshape(1, 1, 1, -1)

    dx = block(x, w0, b0)
    dx = block(dx, w1, b1)
    return jnp.transpose(x_s + dx, (0, 3, 1, 2))


if __name__ == "__main__":
    # Module config: fin=4, fout=8 -> learned shortcut; fhid = min(fin, fout) = 4
    N, FIN, FOUT, H, W = 2, 4, 8, 16, 16
    FHID = min(FIN, FOUT)

    key = jax.random.PRNGKey(0)
    kx, k0, kb0, k1, kb1, ks = jax.random.split(key, 6)

    x = jax.random.normal(kx, (N, FIN, H, W), jnp.float32)

    # Synthetic weights (HWIO for 3x3 convs, (Cin, Cout) for the 1x1 shortcut).
    w0 = jax.random.normal(k0, (3, 3, FIN, FHID), jnp.float32) * 0.1
    b0 = jax.random.normal(kb0, (FHID,), jnp.float32) * 0.1
    w1 = jax.random.normal(k1, (3, 3, FHID, FOUT), jnp.float32) * 0.1
    b1 = jax.random.normal(kb1, (FOUT,), jnp.float32) * 0.1
    ws = jax.random.normal(ks, (FIN, FOUT), jnp.float32) * 0.1

    out = act_first_res_block(x, w0, b0, w1, b1, ws)
    out = jax.block_until_ready(out)

    ref = _reference(x, w0, b0, w1, b1, ws)
    assert out.shape == (N, FOUT, H, W)
    assert jnp.allclose(out, ref, atol=1e-4, rtol=1e-4), "mismatch vs JAX reference"

    print("KERNEL_OK")
</pallas_src>

<mosaic_0001>
module attributes {stable_mosaic.version = 11 : i64} {
  func.func @_res_block_kernel(%arg0: i32, %arg1: memref<4x256xf32, #tpu.memory_space<vmem>>, %arg2: memref<4x48xf32, #tpu.memory_space<vmem>>, %arg3: memref<8x48xf32, #tpu.memory_space<vmem>>, %arg4: memref<8x256xf32, #tpu.memory_space<vmem>>) attributes {dimension_semantics = [#tpu.dimension_semantics<parallel>], iteration_bounds = array<i64: 2>, scalar_prefetch = 0 : i64, scratch_operands = 0 : i64, tpu.core_type = #tpu.core_type<tc>, window_params = [{transform_indices = @transform_0, window_bounds = array<i64: 4, 256>}, {pipeline_mode = #tpu.pipeline_mode<synchronous>, transform_indices = @transform_1, window_bounds = array<i64: 4, 48>}, {pipeline_mode = #tpu.pipeline_mode<synchronous>, transform_indices = @transform_2, window_bounds = array<i64: 8, 48>}, {transform_indices = @transform_3, window_bounds = array<i64: 8, 256>}]} {
    %c0 = arith.constant 0 : index
    %c0_0 = arith.constant 0 : index
    %0 = vector.load %arg1[%c0, %c0_0] : memref<4x256xf32, #tpu.memory_space<vmem>>, vector<4x256xf32>
    %1 = tpu.iota {dimensions = array<i32: 1>} : vector<1x256xi32>
    %c15_i32 = arith.constant 15 : i32
    %2 = vector.broadcast %c15_i32 : i32 to vector<1x256xi32>
    %3 = arith.andi %1, %2 : vector<1x256xi32>
    %c16_i32 = arith.constant 16 : i32
    %4 = vector.broadcast %c16_i32 : i32 to vector<1x256xi32>
    %5 = arith.cmpi slt, %1, %4 : vector<1x256xi32>
    %c240_i32 = arith.constant 240 : i32
    %6 = vector.broadcast %c240_i32 : i32 to vector<1x256xi32>
    %7 = arith.cmpi sge, %1, %6 : vector<1x256xi32>
    %c0_i32 = arith.constant 0 : i32
    %8 = vector.broadcast %c0_i32 : i32 to vector<1x256xi32>
    %9 = arith.cmpi eq, %3, %8 : vector<1x256xi32>
    %c15_i32_1 = arith.constant 15 : i32
    %10 = vector.broadcast %c15_i32_1 : i32 to vector<1x256xi32>
    %11 = arith.cmpi eq, %3, %10 : vector<1x256xi32>
    %cst = arith.constant 1.000000e+00 : f32
    %12 = vector.broadcast %cst : f32 to vector<1x256xf32>
    %cst_2 = arith.constant 0.000000e+00 : f32
    %13 = vector.broadcast %cst_2 : f32 to vector<7x256xf32>
    %cst_3 = arith.constant 2.000000e-01 : f32
    %14 = vector.broadcast %cst_3 : f32 to vector<4x256xf32>
    %15 = arith.mulf %14, %0 : vector<4x256xf32>
    %16 = arith.maximumf %0, %15 : vector<4x256xf32>
    %c240_i32_4 = arith.constant 240 : i32
    %17 = tpu.dynamic_rotate %16 by %c240_i32_4 dim 1 : vector<4x256xf32>, i32 -> vector<4x256xf32>
    %c16_i32_5 = arith.constant 16 : i32
    %18 = tpu.dynamic_rotate %16 by %c16_i32_5 dim 1 : vector<4x256xf32>, i32 -> vector<4x256xf32>
    %19 = vector.shape_cast %5 : vector<1x256xi1> to vector<1x256xi1>
    %20 = vector.broadcast %19 : vector<1x256xi1> to vector<4x256xi1>
    %21 = arith.select %20, %17, %18 : vector<4x256xi1>, vector<4x256xf32>
    %22 = vector.shape_cast %7 : vector<1x256xi1> to vector<1x256xi1>
    %23 = vector.broadcast %22 : vector<1x256xi1> to vector<4x256xi1>
    %24 = arith.select %23, %18, %17 : vector<4x256xi1>, vector<4x256xf32>
    %c1_i32 = arith.constant 1 : i32
    %25 = tpu.dynamic_rotate %21 by %c1_i32 dim 1 : vector<4x256xf32>, i32 -> vector<4x256xf32>
    %c255_i32 = arith.constant 255 : i32
    %26 = tpu.dynamic_rotate %21 by %c255_i32 dim 1 : vector<4x256xf32>, i32 -> vector<4x256xf32>
    %27 = vector.shape_cast %9 : vector<1x256xi1> to vector<1x256xi1>
    %28 = vector.broadcast %27 : vector<1x256xi1> to vector<4x256xi1>
    %29 = arith.select %28, %26, %25 : vector<4x256xi1>, vector<4x256xf32>
    %30 = vector.shape_cast %11 : vector<1x256xi1> to vector<1x256xi1>
    %31 = vector.broadcast %30 : vector<1x256xi1> to vector<4x256xi1>
    %32 = arith.select %31, %25, %26 : vector<4x256xi1>, vector<4x256xf32>
    %c1_i32_6 = arith.constant 1 : i32
    %33 = tpu.dynamic_rotate %16 by %c1_i32_6 dim 1 : vector<4x256xf32>, i32 -> vector<4x256xf32>
    %c255_i32_7 = arith.constant 255 : i32
    %34 = tpu.dynamic_rotate %16 by %c255_i32_7 dim 1 : vector<4x256xf32>, i32 -> vector<4x256xf32>
    %35 = vector.shape_cast %9 : vector<1x256xi1> to vector<1x256xi1>
    %36 = vector.broadcast %35 : vector<1x256xi1> to vector<4x256xi1>
    %37 = arith.select %36, %34, %33 : vector<4x256xi1>, vector<4x256xf32>
    %38 = vector.shape_cast %11 : vector<1x256xi1> to vector<1x256xi1>
    %39 = vector.broadcast %38 : vector<1x256xi1> to vector<4x256xi1>
    %40 = arith.select %39, %33, %34 : vector<4x256xi1>, vector<4x256xf32>
    %c1_i32_8 = arith.constant 1 : i32
    %41 = tpu.dynamic_rotate %24 by %c1_i32_8 dim 1 : vector<4x256xf32>, i32 -> vector<4x256xf32>
    %c255_i32_9 = arith.constant 255 : i32
    %42 = tpu.dynamic_rotate %24 by %c255_i32_9 dim 1 : vector<4x256xf32>, i32 -> vector<4x256xf32>
    %43 = vector.shape_cast %9 : vector<1x256xi1> to vector<1x256xi1>
    %44 = vector.broadcast %43 : vector<1x256xi1> to vector<4x256xi1>
    %45 = arith.select %44, %42, %41 : vector<4x256xi1>, vector<4x256xf32>
    %46 = vector.shape_cast %11 : vector<1x256xi1> to vector<1x256xi1>
    %47 = vector.broadcast %46 : vector<1x256xi1> to vector<4x256xi1>
    %48 = arith.select %47, %41, %42 : vector<4x256xi1>, vector<4x256xf32>
    %49 = tpu.concatenate %29, %21, %32, %37, %16, %40, %45, %24, %48, %0, %12, %13 in 0 : vector<4x256xf32>, vector<4x256xf32>, vector<4x256xf32>, vector<4x256xf32>, vector<4x256xf32>, vector<4x256xf32>, vector<4x256xf32>, vector<4x256xf32>, vector<4x256xf32>, vector<4x256xf32>, vector<1x256xf32>, vector<7x256xf32> -> vector<48x256xf32>
    %c0_10 = arith.constant 0 : index
    %c0_11 = arith.constant 0 : index
    %50 = vector.load %arg2[%c0_10, %c0_11] : memref<4x48xf32, #tpu.memory_space<vmem>>, vector<4x48xf32>
    %cst_12 = arith.constant dense<0.000000e+00> : vector<4x256xf32>
    %51 = tpu.matmul %50, %49, %cst_12 {dimension_numbers = #tpu.dot_dimension_numbers<[1], [0], [0], [1], [0, 0, 1, 1], [], []>} : vector<4x48xf32>, vector<48x256xf32>, vector<4x256xf32> -> vector<4x256xf32>
    %cst_13 = arith.constant 2.000000e-01 : f32
    %52 = vector.broadcast %cst_13 : f32 to vector<4x256xf32>
    %53 = arith.mulf %52, %51 : vector<4x256xf32>
    %54 = arith.maximumf %51, %53 : vector<4x256xf32>
    %c240_i32_14 = arith.constant 240 : i32
    %55 = tpu.dynamic_rotate %54 by %c240_i32_14 dim 1 : vector<4x256xf32>, i32 -> vector<4x256xf32>
    %c16_i32_15 = arith.constant 16 : i32
    %56 = tpu.dynamic_rotate %54 by %c16_i32_15 dim 1 : vector<4x256xf32>, i32 -> vector<4x256xf32>
    %57 = vector.shape_cast %5 : vector<1x256xi1> to vector<1x256xi1>
    %58 = vector.broadcast %57 : vector<1x256xi1> to vector<4x256xi1>
    %59 = arith.select %58, %55, %56 : vector<4x256xi1>, vector<4x256xf32>
    %60 = vector.shape_cast %7 : vector<1x256xi1> to vector<1x256xi1>
    %61 = vector.broadcast %60 : vector<1x256xi1> to vector<4x256xi1>
    %62 = arith.select %61, %56, %55 : vector<4x256xi1>, vector<4x256xf32>
    %c1_i32_16 = arith.constant 1 : i32
    %63 = tpu.dynamic_rotate %59 by %c1_i32_16 dim 1 : vector<4x256xf32>, i32 -> vector<4x256xf32>
    %c255_i32_17 = arith.constant 255 : i32
    %64 = tpu.dynamic_rotate %59 by %c255_i32_17 dim 1 : vector<4x256xf32>, i32 -> vector<4x256xf32>
    %65 = vector.shape_cast %9 : vector<1x256xi1> to vector<1x256xi1>
    %66 = vector.broadcast %65 : vector<1x256xi1> to vector<4x256xi1>
    %67 = arith.select %66, %64, %63 : vector<4x256xi1>, vector<4x256xf32>
    %68 = vector.shape_cast %11 : vector<1x256xi1> to vector<1x256xi1>
    %69 = vector.broadcast %68 : vector<1x256xi1> to vector<4x256xi1>
    %70 = arith.select %69, %63, %64 : vector<4x256xi1>, vector<4x256xf32>
    %c1_i32_18 = arith.constant 1 : i32
    %71 = tpu.dynamic_rotate %54 by %c1_i32_18 dim 1 : vector<4x256xf32>, i32 -> vector<4x256xf32>
    %c255_i32_19 = arith.constant 255 : i32
    %72 = tpu.dynamic_rotate %54 by %c255_i32_19 dim 1 : vector<4x256xf32>, i32 -> vector<4x256xf32>
    %73 = vector.shape_cast %9 : vector<1x256xi1> to vector<1x256xi1>
    %74 = vector.broadcast %73 : vector<1x256xi1> to vector<4x256xi1>
    %75 = arith.select %74, %72, %71 : vector<4x256xi1>, vector<4x256xf32>
    %76 = vector.shape_cast %11 : vector<1x256xi1> to vector<1x256xi1>
    %77 = vector.broadcast %76 : vector<1x256xi1> to vector<4x256xi1>
    %78 = arith.select %77, %71, %72 : vector<4x256xi1>, vector<4x256xf32>
    %c1_i32_20 = arith.constant 1 : i32
    %79 = tpu.dynamic_rotate %62 by %c1_i32_20 dim 1 : vector<4x256xf32>, i32 -> vector<4x256xf32>
    %c255_i32_21 = arith.constant 255 : i32
    %80 = tpu.dynamic_rotate %62 by %c255_i32_21 dim 1 : vector<4x256xf32>, i32 -> vector<4x256xf32>
    %81 = vector.shape_cast %9 : vector<1x256xi1> to vector<1x256xi1>
    %82 = vector.broadcast %81 : vector<1x256xi1> to vector<4x256xi1>
    %83 = arith.select %82, %80, %79 : vector<4x256xi1>, vector<4x256xf32>
    %84 = vector.shape_cast %11 : vector<1x256xi1> to vector<1x256xi1>
    %85 = vector.broadcast %84 : vector<1x256xi1> to vector<4x256xi1>
    %86 = arith.select %85, %79, %80 : vector<4x256xi1>, vector<4x256xf32>
    %87 = tpu.concatenate %67, %59, %70, %75, %54, %78, %83, %62, %86, %0, %12, %13 in 0 : vector<4x256xf32>, vector<4x256xf32>, vector<4x256xf32>, vector<4x256xf32>, vector<4x256xf32>, vector<4x256xf32>, vector<4x256xf32>, vector<4x256xf32>, vector<4x256xf32>, vector<4x256xf32>, vector<1x256xf32>, vector<7x256xf32> -> vector<48x256xf32>
    %c0_22 = arith.constant 0 : index
    %c0_23 = arith.constant 0 : index
    %88 = vector.load %arg3[%c0_22, %c0_23] : memref<8x48xf32, #tpu.memory_space<vmem>>, vector<8x48xf32>
    %cst_24 = arith.constant dense<0.000000e+00> : vector<8x256xf32>
    %89 = tpu.matmul %88, %87, %cst_24 {dimension_numbers = #tpu.dot_dimension_numbers<[1], [0], [0], [1], [0, 0, 1, 1], [], []>} : vector<8x48xf32>, vector<48x256xf32>, vector<8x256xf32> -> vector<8x256xf32>
    %c0_25 = arith.constant 0 : index
    %c0_26 = arith.constant 0 : index
    %90 = vector.load %arg4[%c0_25, %c0_26] : memref<8x256xf32, #tpu.memory_space<vmem>>, vector<8x256xf32>
    tpu.vector_store %arg4[%c0_25, %c0_26], %89 {strides = array<i32>} : memref<8x256xf32, #tpu.memory_space<vmem>>, vector<8x256xf32>,
    return
  }
  func.func @transform_0(%arg0: i32) -> (i32, i32) {
    %c0_i32 = arith.constant 0 : i32
    %c0_i32_0 = arith.constant 0 : i32
    return %c0_i32, %arg0 : i32, i32
  }
  func.func @transform_1(%arg0: i32) -> (i32, i32) {
    %c0_i32 = arith.constant 0 : i32
    %c0_i32_0 = arith.constant 0 : i32
    %c0_i32_1 = arith.constant 0 : i32
    return %c0_i32, %c0_i32_0 : i32, i32
  }
  func.func @transform_2(%arg0: i32) -> (i32, i32) {
    %c0_i32 = arith.constant 0 : i32
    %c0_i32_0 = arith.constant 0 : i32
    %c0_i32_1 = arith.constant 0 : i32
    return %c0_i32, %c0_i32_0 : i32, i32
  }
  func.func @transform_3(%arg0: i32) -> (i32, i32) {
    %c0_i32 = arith.constant 0 : i32
    %c0_i32_0 = arith.constant 0 : i32
    return %c0_i32, %arg0 : i32, i32
  }
}

</mosaic_0001>

<llo_original>
// kernel: act_first_res_block.1
$region0: #{act_first_res_block.1}
  #allocation0 [shape = 'u32[]', space=smem, size = 0x4, offset = 0x4, fixed_abs, tag = 'smem constant byte address 0x4 - core index']
  #allocation1 [shape = 'u32[144,128]{1,0:T(1,128)}', space=vmem, size = 0x12000, scoped, tag = 'internal scratch']
  %s0 = inlined_call_operand.vmem [shape: f32[4,512], index: 0, kind: input, shape index: {}]
  %s1 = inlined_call_operand.vmem [shape: f32[4,48], index: 1, kind: input, shape index: {}]
  %s2 = inlined_call_operand.vmem [shape: f32[8,48], index: 2, kind: input, shape index: {}]
  %s3 = inlined_call_operand.vmem [shape: f32[8,512], index: 3, kind: output, shape index: {}]
  %s4 = sld [smem:[#allocation0]]
  $region45: #{act_first_res_block.1} parent=0
    _
  %s6 = ssub.s32 1, %s4
  %s7 = scalar_select 0, %s6, %s4
  loop: start=0, step=1, limit=4
  $region2: #{act_first_res_block.1} parent=0 // loop_pre_header
    _
  $region3: #{act_first_res_block.1} parent=0 // loop_header
    %s9 = sphi 0, %s13
    %p10 = scmp.ge.s32.totalorder %s9, 4
    %s19 = sphi 0, %s21
    %s22 = sphi 0, %s19
    %s23 = sphi 0, %s22
    %s39 = sphi 0, %s23
    %s43 = sphi 0, %s43
    %s45 = sphi 0, %s43
    %s46 = sphi 0, %s45
    %s60 = sphi 0, %s46
    %s64 = sphi 0, %s64
    %s66 = sphi 0, %s64
    %s67 = sphi 0, %s66
    %s81 = sphi 0, %s67
    %s87 = sphi 0, %s89
    %s90 = sphi 0, %s87
    %s91 = sphi 0, %s90
    %s107 = sphi 0, %s91
  $region4: #{act_first_res_block.1} parent=0 // loop_header_branch
    %12 = sbr.rel (%p10) target = $region8
  $region5: #{act_first_res_block.1} parent=0 // loop_body
    %s14 = ssub.s32 %s9, 1
    %s15 = ssub.s32 %s9, 2
    %s16 = sadd.s32 %s9, 1
    %s17 = ssub.s32 %s9, %s16
    %p18 = scmp.eq.s32.totalorder %s17, 0
    %s20 = sadd.s32 %s19, 1
    %s21 = scalar_select %p18, %s19, %s20
    %p24 = pneg %p18
    %p25 = scmp.eq.s32.totalorder %s9, 1
    %p26 = por %p24, %p25
    %p27 = scmp.ne.s32.totalorder %s19, %s22
    %p28 = scmp.eq.s32.totalorder %s9, 0
    %p29 = por %p27, %p28
    %p30 = scmp.ne.s32.totalorder %s19, %s22
    %p31 = scmp.eq.s32.totalorder %s14, 1
    %p32 = por %p30, %p31
    %p33 = scmp.ne.s32.totalorder %s22, %s23
    %p34 = scmp.eq.s32.totalorder %s14, 0
    %p35 = por %p33, %p34
    %p36 = scmp.ne.s32.totalorder %s22, %s23
    %p37 = scmp.eq.s32.totalorder %s15, 1
    %p38 = por %p36, %p37
    %p40 = scmp.ne.s32.totalorder %s23, %s39
    %p41 = scmp.eq.s32.totalorder %s15, 0
    %p42 = por %p40, %p41
    %s44 = sadd.s32 %s43, 1
    %p47 = scmp.eq.s32.totalorder %s9, 1
    %p48 = scmp.ne.s32.totalorder %s43, %s45
    %p49 = scmp.eq.s32.totalorder %s9, 0
    %p50 = por %p48, %p49
    %p51 = scmp.ne.s32.totalorder %s43, %s45
    %p52 = scmp.eq.s32.totalorder %s14, 1
    %p53 = por %p51, %p52
    %p54 = scmp.ne.s32.totalorder %s45, %s46
    %p55 = scmp.eq.s32.totalorder %s14, 0
    %p56 = por %p54, %p55
    %p57 = scmp.ne.s32.totalorder %s45, %s46
    %p58 = scmp.eq.s32.totalorder %s15, 1
    %p59 = por %p57, %p58
    %p61 = scmp.ne.s32.totalorder %s46, %s60
    %p62 = scmp.eq.s32.totalorder %s15, 0
    %p63 = por %p61, %p62
    %s65 = sadd.s32 %s64, 1
    %p68 = scmp.eq.s32.totalorder %s9, 1
    %p69 = scmp.ne.s32.totalorder %s64, %s66
    %p70 = scmp.eq.s32.totalorder %s9, 0
    %p71 = por %p69, %p70
    %p72 = scmp.ne.s32.totalorder %s64, %s66
    %p73 = scmp.eq.s32.totalorder %s14, 1
    %p74 = por %p72, %p73
    %p75 = scmp.ne.s32.totalorder %s66, %s67
    %p76 = scmp.eq.s32.totalorder %s14, 0
    %p77 = por %p75, %p76
    %p78 = scmp.ne.s32.totalorder %s66, %s67
    %p79 = scmp.eq.s32.totalorder %s15, 1
    %p80 = por %p78, %p79
    %p82 = scmp.ne.s32.totalorder %s67, %s81
    %p83 = scmp.eq.s32.totalorder %s15, 0
    %p84 = por %p82, %p83
    %s85 = ssub.s32 %s9, %s16
    %p86 = scmp.eq.s32.totalorder %s85, 0
    %s88 = sadd.s32 %s87, 1
    %s89 = scalar_select %p86, %s87, %s88
    %p92 = pneg %p86
    %p93 = scmp.eq.s32.totalorder %s9, 1
    %p94 = por %p92, %p93
    %p95 = scmp.ne.s32.totalorder %s87, %s90
    %p96 = scmp.eq.s32.totalorder %s9, 0
    %p97 = por %p95, %p96
    %p98 = scmp.ne.s32.totalorder %s87, %s90
    %p99 = scmp.eq.s32.totalorder %s14, 1
    %p100 = por %p98, %p99
    %p101 = scmp.ne.s32.totalorder %s90, %s91
    %p102 = scmp.eq.s32.totalorder %s14, 0
    %p103 = por %p101, %p102
    %p104 = scmp.ne.s32.totalorder %s90, %s91
    %p105 = scmp.eq.s32.totalorder %s15, 1
    %p106 = por %p104, %p105
    %p108 = scmp.ne.s32.totalorder %s91, %s107
    %p109 = scmp.eq.s32.totalorder %s15, 0
    %p110 = por %p108, %p109
    %p111 = scmp.le.s32.totalorder 1, %s9
    %p112 = scmp.lt.s32.totalorder %s9, 3
    %p113 = pnand %p111, %p112
    %p114 = pneg %p113
    // Predicated region
    $region9: #{act_first_res_block.1} parent=5 // pred_check
      _
    $region10: #{act_first_res_block.1} parent=5 // pred_check_branch
      %116 = sbr.rel (%p113) target = $region12
    $region11: #{act_first_res_block.1} parent=5 // pred_region
      %s117 = ssub.s32 %s9, 1
      // Predicated region
      $region13: #{act_first_res_block.1} parent=11 // pred_check
        %p118 = pneg %p56
      $region14: #{act_first_res_block.1} parent=11 // pred_check_branch
        %120 = sbr.rel (%p118) target = $region16
      $region15: #{act_first_res_block.1} parent=11 // pred_region
        _
      $region16: #{act_first_res_block.1} parent=11 // pred_fallthru
        _
      // Predicated region
      $region17: #{act_first_res_block.1} parent=11 // pred_check
        %p121 = pneg %p77
      $region18: #{act_first_res_block.1} parent=11 // pred_check_branch
        %123 = sbr.rel (%p121) target = $region20
      $region19: #{act_first_res_block.1} parent=11 // pred_region
        _
      $region20: #{act_first_res_block.1} parent=11 // pred_fallthru
        _
    $region12: #{act_first_res_block.1} parent=5 // pred_fallthru
      _
    %p124 = scmp.lt.s32.totalorder %s9, 2
    // Predicated region
    $region21: #{act_first_res_block.1} parent=5 // pred_check
      %p125 = pneg %p124
    $region22: #{act_first_res_block.1} parent=5 // pred_check_branch
      %127 = sbr.rel (%p125) target = $region24
    $region23: #{act_first_res_block.1} parent=5 // pred_region
      // Predicated region
      $region25: #{act_first_res_block.1} parent=23 // pred_check
        %p128 = pneg %p29
      $region26: #{act_first_res_block.1} parent=23 // pred_check_branch
        %130 = sbr.rel (%p128) target = $region28
      $region27: #{act_first_res_block.1} parent=23 // pred_region
        %s131 = smul.u32 2, %s9
        %p132 = scmp.lt.s32.totalorder %s131, 3
        %s133 = scalar_select %p132, %s131, 3
        %s134 = smul.addr %s133, 4
        %s135 = scalar_lea.vmem %s0, %s134
        %s136 = smul.u32 2, %s9
      $region28: #{act_first_res_block.1} parent=23 // pred_fallthru
        _
    $region24: #{act_first_res_block.1} parent=5 // pred_fallthru
      _
    %p137 = scmp.le.s32.totalorder 1, %s9
    %p138 = scmp.lt.s32.totalorder %s9, 3
    %p139 = pnand %p137, %p138
    %p140 = pneg %p139
    // Predicated region
    $region29: #{act_first_res_block.1} parent=5 // pred_check
      _
    $region30: #{act_first_res_block.1} parent=5 // pred_check_branch
      %142 = sbr.rel (%p139) target = $region32
    $region31: #{act_first_res_block.1} parent=5 // pred_region
      %s143 = ssub.s32 %s9, 1
      %s144 = smul.u32 2, %s14
      %p145 = scmp.lt.s32.totalorder %s144, 3
      %s146 = scalar_select %p145, %s144, 3
      %s147 = smul.addr %s146, 4
      %s148 = scalar_lea.vmem %s0, %s147
      %p149 = pneg %p35
      %p150 = pneg %p32
      %p151 = pneg %p56
      %p152 = pneg %p53
      %p153 = pneg %p77
      %p154 = pneg %p74
      %p155 = pneg %p103
      %p156 = pneg %p100
      %s157 = smul.u32 2, %s14
      %p158 = scmp.lt.s32.totalorder %s157, 3
      %s159 = scalar_select %p158, %s157, 3
      %s160 = smul.addr %s159, 8
      %s161 = scalar_lea.vmem %s3, %s160
      %s162 = smul.u32 2, %s14
      %p163 = scmp.lt.s32.totalorder %s162, 3
      %s164 = scalar_select %p163, %s162, 3
      %s165 = smul.addr %s164, 4
      %s166 = scalar_lea.vmem %s0, %s165
      %s167 = smul.u32 2, %s14
      %s168 = smul.u32 2, %s14
      %p169 = scmp.lt.s32.totalorder %s168, 3
      %s170 = scalar_select %p169, %s168, 3
      %s171 = smul.addr %s170, 8
      %s172 = scalar_lea.vmem %s3, %s171
      %s173 = smul.u32 2, %s14
      %v174 = vld [vmem:[%s166] sm:$0xff]
      %v175 = vlaneseq
      %v176 = vand.u32 %v175, 127
      %v177 = vadd.s32 %v176, 128
      %v178 = vand.u32 %v176, 15
      %v179 = vand.u32 %v177, 15
      %vm180 = vcmp.lt.s32.totalorder %v176, 16
      %vm181 = vcmp.lt.s32.totalorder %v177, 16
      %vm182 = vcmp.ge.s32.totalorder %v176, 240
      %vm183 = vcmp.ge.s32.totalorder %v177, 240
      %vm184 = vcmp.eq.s32.totalorder %v178, 0
      %vm185 = vcmp.eq.s32.totalorder %v179, 0
      %vm186 = vcmp.eq.s32.totalorder %v178, 15
      %vm187 = vcmp.eq.s32.totalorder %v179, 15
      %v188 = vmul.f32 %v174, 0.2
      %v189 = vmax.f32 %v174, %v188
      %v191 = vcombine.high %v189, %v189
      %193 = vrot.lane.b32.xlu0 %v189, 112
      %v194 = vpop.permute.xlu0 %193
      %195 = vrot.lane.b32.xlu0 %v191, 112
      %v196 = vpop.permute.xlu0 %195
      %vm197 = vcmp.lt.s32.totalorder %v176, 112
      %v198 = vsel %vm197, %v194, %v196
      %v199 = vsel %vm197, %v196, %v194
      %200 = vrot.lane.b32.xlu0 %v189, 16
      %v201 = vpop.permute.xlu0 %200
      %202 = vrot.lane.b32.xlu0 %v191, 16
      %v203 = vpop.permute.xlu0 %202
      %v204 = vsel %vm180, %v201, %v203
      %v205 = vsel %vm180, %v203, %v201
      %v206 = vsel %vm180, 1, 0
      %v207 = vsel %vm181, 1, 0
      %vm208 = vcmp.eq.s32.totalorder %v206, 1
      %vm209 = vcmp.eq.s32.totalorder %v207, 1
      %v210 = vsel %vm208, %v198, %v205
      %v211 = vsel %vm209, %v199, %v204
      %v212 = vsel %vm182, 1, 0
      %v213 = vsel %vm183, 1, 0
      %vm214 = vcmp.eq.s32.totalorder %v212, 1
      %vm215 = vcmp.eq.s32.totalorder %v213, 1
      %v216 = vsel %vm214, %v205, %v198
      %v217 = vsel %vm215, %v204, %v199
      %218 = vrot.lane.b32.xlu0 %v210, 1
      %v219 = vpop.permute.xlu0 %218
      %220 = vrot.lane.b32.xlu0 %v211, 1
      %v221 = vpop.permute.xlu0 %220
      %vm222 = vcmp.lt.s32.totalorder %v176, 1
      %v223 = vsel %vm222, %v219, %v221
      %v224 = vsel %vm222, %v221, %v219
      %225 = vrot.lane.b32.xlu0 %v210, 127
      %v226 = vpop.permute.xlu0 %225
      %227 = vrot.lane.b32.xlu0 %v211, 127
      %v228 = vpop.permute.xlu0 %227
      %vm229 = vcmp.lt.s32.totalorder %v176, 127
      %v230 = vsel %vm229, %v226, %v228
      %v231 = vsel %vm229, %v228, %v226
      %v232 = vsel %vm184, 1, 0
      %v233 = vsel %vm185, 1, 0
      %vm234 = vcmp.eq.s32.totalorder %v232, 1
      %vm235 = vcmp.eq.s32.totalorder %v233, 1
      %v236 = vsel %vm234, %v230, %v224
      %v237 = vsel %vm235, %v231, %v223
      %v238 = vsel %vm186, 1, 0
      %v239 = vsel %vm187, 1, 0
      %vm240 = vcmp.eq.s32.totalorder %v238, 1
      %vm241 = vcmp.eq.s32.totalorder %v239, 1
      %v242 = vsel %vm240, %v224, %v230
      %v243 = vsel %vm241, %v223, %v231
      %244 = vrot.lane.b32.xlu0 %v189, 1
      %v245 = vpop.permute.xlu0 %244
      %246 = vrot.lane.b32.xlu0 %v191, 1
      %v247 = vpop.permute.xlu0 %246
      %v248 = vsel %vm222, %v245, %v247
      %v249 = vsel %vm222, %v247, %v245
      %250 = vrot.lane.b32.xlu0 %v189, 127
      %v251 = vpop.permute.xlu0 %250
      %252 = vrot.lane.b32.xlu0 %v191, 127
      %v253 = vpop.permute.xlu0 %252
      %v254 = vsel %vm229, %v251, %v253
      %v255 = vsel %vm229, %v253, %v251
      %v256 = vsel %vm234, %v254, %v249
      %v257 = vsel %vm235, %v255, %v248
      %v258 = vsel %vm240, %v249, %v254
      %v259 = vsel %vm241, %v248, %v255
      %260 = vrot.lane.b32.xlu0 %v216, 1
      %v261 = vpop.permute.xlu0 %260
      %262 = vrot.lane.b32.xlu0 %v217, 1
      %v263 = vpop.permute.xlu0 %262
      %v264 = vsel %vm222, %v261, %v263
      %v265 = vsel %vm222, %v263, %v261
      %266 = vrot.lane.b32.xlu0 %v216, 127
      %v267 = vpop.permute.xlu0 %266
      %268 = vrot.lane.b32.xlu0 %v217, 127
      %v269 = vpop.permute.xlu0 %268
      %v270 = vsel %vm229, %v267, %v269
      %v271 = vsel %vm229, %v269, %v267
      %v272 = vsel %vm234, %v270, %v265
      %v273 = vsel %vm235, %v271, %v264
      %v274 = vsel %vm240, %v265, %v270
      %v275 = vsel %vm241, %v264, %v271
      %v278 = vrot.slane %v210, 4
      %v279 = vrot.slane %v211, 4
      %v284 = vrot.slane %v256, 4
      %v285 = vrot.slane %v257, 4
      %v290 = vrot.slane %v258, 4
      %v291 = vrot.slane %v259, 4
      %v296 = vrot.slane %v216, 4
      %v297 = vrot.slane %v217, 4
      %v301 = vcombine.low %v174, %v174
      %vm303 = vcmask 1043456
      %v304 = vsel %vm303, %v236, %v278
      %v305 = vsel %vm303, %v237, %v279
      %v306 = vsel %vm303, %v242, %v284
      %v307 = vsel %vm303, %v243, %v285
      %v308 = vsel %vm303, %v189, %v290
      %v309 = vsel %vm303, %v191, %v291
      %v310 = vsel %vm303, %v272, %v296
      %v311 = vsel %vm303, %v273, %v297
      %v312 = vsel %vm303, %v274, %v301
      %v313 = vsel %vm303, %v275, %v174
      %vm314 = vcmask 1040384
      %v315 = vsel %vm314, 1.0, 0.0
      %v316 = vld [vmem:[%s1] sm:$0xf]
      %vm317 = vcmask 392192
      %v319 = vsel %vm317, %v316, 0
      %321 = vmatprep.subr.mxu0 %v305
      %322 = vmatpush1.msra.mxu0 %v304
      %323 = vmatprep.subr.mxu0 %v307
      %324 = vmatpush1.msra.mxu0 %v306
      %325 = vmatprep.subr.mxu0 %v309
      %326 = vmatpush1.msra.mxu0 %v308
      %327 = vmatprep.subr.mxu0 %v311
      %328 = vmatpush1.msra.mxu0 %v310
      %329 = vmatprep.subr.mxu0 %v313
      %330 = vmatpush1.msra.mxu0 %v312
      %331 = vmatprep.subr.mxu0 %v315
      %332 = vmatpush1.msra.mxu0 %v315
      %333 = vmatprep.subr.mxu0 0.0
      %334 = vmatpush1.msra.mxu0 0.0
      %335 = vmatprep.subr.mxu0 0.0
      %336 = vmatpush1.msra.mxu0 0.0
      %337 = vmatprep.subr.mxu0 0.0
      %338 = vmatpush1.msra.mxu0 0.0
      %339 = vmatprep.subr.mxu0 0.0
      %340 = vmatpush1.msra.mxu0 0.0
      %341 = vmatprep.subr.mxu0 0.0
      %342 = vmatpush1.msra.mxu0 0.0
      %343 = vmatprep.subr.mxu0 0.0
      %344 = vmatpush1.msra.mxu0 0.0
      %345 = vmatprep.subr.mxu0 0.0
      %346 = vmatpush1.msra.mxu0 0.0
      %347 = vmatprep.subr.mxu0 0.0
      %348 = vmatpush1.msra.mxu0 0.0
      %349 = vmatprep.subr.mxu0 0.0
      %350 = vmatpush1.msra.mxu0 0.0
      %351 = vmatprep.subr.mxu0 0.0
      %352 = vmatpush1.msra.mxu0 0.0
      %353 = vmatprep.subr.mxu0 0.0
      %354 = vmatpush1.msra.mxu0 0.0
      %355 = vmatprep.subr.mxu0 0.0
      %356 = vmatpush1.msra.mxu0 0.0
      %357 = vmatprep.subr.mxu0 0.0
      %358 = vmatpush1.msra.mxu0 0.0
      %359 = vmatprep.subr.mxu0 0.0
      %360 = vmatpush1.msra.mxu0 0.0
      %361 = vmatprep.subr.mxu0 0.0
      %362 = vmatpush1.msra.mxu0 0.0
      %363 = vmatprep.subr.mxu0 0.0
      %364 = vmatpush1.msra.mxu0 0.0
      %365 = vmatprep.subr.mxu0 0.0
      %366 = vmatpush1.msra.mxu0 0.0
      %367 = vmatprep.subr.mxu0 0.0
      %368 = vmatpush1.msra.mxu0 0.0
      %369 = vmatprep.subr.mxu0 0.0
      %370 = vmatpush1.msra.mxu0 0.0
      %371 = vmatprep.subr.mxu0 0.0
      %372 = vmatpush1.msra.mxu0 0.0
      %373 = vmatprep.subr.mxu0 0.0
      %374 = vmatpush1.msra.mxu0 0.0
      %375 = vmatprep.subr.mxu0 0.0
      %376 = vmatpush1.msra.mxu0 0.0
      %377 = vmatprep.subr.mxu0 0.0
      %378 = vmatpush1.msra.mxu0 0.0
      %379 = vmatprep.subr.mxu0 0.0
      %380 = vmatpush1.msra.mxu0 0.0
      %381 = vmatprep.subr.mxu0 0.0
      %382 = vmatpush1.msra.mxu0 0.0
      %383 = vmatprep.subr.mxu0 0.0
      %384 = vmatpush1.msra.mxu0 0.0
      %385 = vmatprep.mubr.f32.mxu0 0.0
      %386 = vmatmul.mubr.f32.gmra.mrb[0].mxu0 %v319
      %v387 = vpop.f32.mrb[0].mxu0
      %v388 = vadd.f32 0.0, %v387
      %v389 = vpop.f32.mrb[0].mxu0
      %v390 = vadd.f32 0.0, %v389
      %391 = vdwg.mxu0
      %v392 = vmul.f32 %v388, 0.2
      %v393 = vmul.f32 %v390, 0.2
      %v394 = vmax.f32 %v388, %v392
      %v395 = vmax.f32 %v390, %v393
      %396 = vrot.lane.b32.xlu0 %v394, 112
      %v397 = vpop.permute.xlu0 %396
      %398 = vrot.lane.b32.xlu0 %v395, 112
      %v399 = vpop.permute.xlu0 %398
      %v400 = vsel %vm197, %v397, %v399
      %v401 = vsel %vm197, %v399, %v397
      %402 = vrot.lane.b32.xlu0 %v394, 16
      %v403 = vpop.permute.xlu0 %402
      %404 = vrot.lane.b32.xlu0 %v395, 16
      %v405 = vpop.permute.xlu0 %404
      %v406 = vsel %vm180, %v403, %v405
      %v407 = vsel %vm180, %v405, %v403
      %v408 = vsel %vm208, %v400, %v407
      %v409 = vsel %vm209, %v401, %v406
      %v410 = vsel %vm214, %v407, %v400
      %v411 = vsel %vm215, %v406, %v401
      %412 = vrot.lane.b32.xlu0 %v408, 1
      %v413 = vpop.permute.xlu0 %412
      %414 = vrot.lane.b32.xlu0 %v409, 1
      %v415 = vpop.permute.xlu0 %414
      %v416 = vsel %vm222, %v413, %v415
      %v417 = vsel %vm222, %v415, %v413
      %418 = vrot.lane.b32.xlu0 %v408, 127
      %v419 = vpop.permute.xlu0 %418
      %420 = vrot.lane.b32.xlu0 %v409, 127
      %v421 = vpop.permute.xlu0 %420
      %v422 = vsel %vm229, %v419, %v421
      %v423 = vsel %vm229, %v421, %v419
      %v424 = vsel %vm234, %v422, %v417
      %v425 = vsel %vm235, %v423, %v416
      %v426 = vsel %vm240, %v417, %v422
      %v427 = vsel %vm241, %v416, %v423
      %428 = vrot.lane.b32.xlu0 %v394, 1
      %v429 = vpop.permute.xlu0 %428
      %430 = vrot.lane.b32.xlu0 %v395, 1
      %v431 = vpop.permute.xlu0 %430
      %v432 = vsel %vm222, %v429, %v431
      %v433 = vsel %vm222, %v431, %v429
      %434 = vrot.lane.b32.xlu0 %v394, 127
      %v435 = vpop.permute.xlu0 %434
      %436 = vrot.lane.b32.xlu0 %v395, 127
      %v437 = vpop.permute.xlu0 %436
      %v438 = vsel %vm229, %v435, %v437
      %v439 = vsel %vm229, %v437, %v435
      %v440 = vsel %vm234, %v438, %v433
      %v441 = vsel %vm235, %v439, %v432
      %v442 = vsel %vm240, %v433, %v438
      %v443 = vsel %vm241, %v432, %v439
      %444 = vrot.lane.b32.xlu0 %v410, 1
      %v445 = vpop.permute.xlu0 %444
      %446 = vrot.lane.b32.xlu0 %v411, 1
      %v447 = vpop.permute.xlu0 %446
      %v448 = vsel %vm222, %v445, %v447
      %v449 = vsel %vm222, %v447, %v445
      %450 = vrot.lane.b32.xlu0 %v410, 127
      %v451 = vpop.permute.xlu0 %450
      %452 = vrot.lane.b32.xlu0 %v411, 127
      %v453 = vpop.permute.xlu0 %452
      %v454 = vsel %vm229, %v451, %v453
      %v455 = vsel %vm229, %v453, %v451
      %v456 = vsel %vm234, %v454, %v449
      %v457 = vsel %vm235, %v455, %v448
      %v458 = vsel %vm240, %v449, %v454
      %v459 = vsel %vm241, %v448, %v455
      %v462 = vrot.slane %v408, 4
      %v463 = vrot.slane %v409, 4
      %v468 = vrot.slane %v440, 4
      %v469 = vrot.slane %v441, 4
      %v474 = vrot.slane %v442, 4
      %v475 = vrot.slane %v443, 4
      %v480 = vrot.slane %v410, 4
      %v481 = vrot.slane %v411, 4
      %v484 = vsel %vm303, %v424, %v462
      %v485 = vsel %vm303, %v425, %v463
      %v486 = vsel %vm303, %v426, %v468
      %v487 = vsel %vm303, %v427, %v469
      %v488 = vsel %vm303, %v394, %v474
      %v489 = vsel %vm303, %v395, %v475
      %v490 = vsel %vm303, %v456, %v480
      %v491 = vsel %vm303, %v457, %v481
      %v492 = vsel %vm303, %v458, %v301
      %v493 = vsel %vm303, %v459, %v174
      %v494 = vld [vmem:[%s2] sm:$0xff]
      %v496 = vsel %vm317, %v494, 0
      %498 = vmatprep.subr.mxu0 %v485
      %499 = vmatpush1.msra.mxu0 %v484
      %500 = vmatprep.subr.mxu0 %v487
      %501 = vmatpush1.msra.mxu0 %v486
      %502 = vmatprep.subr.mxu0 %v489
      %503 = vmatpush1.msra.mxu0 %v488
      %504 = vmatprep.subr.mxu0 %v491
      %505 = vmatpush1.msra.mxu0 %v490
      %506 = vmatprep.subr.mxu0 %v493
      %507 = vmatpush1.msra.mxu0 %v492
      %508 = vmatprep.subr.mxu0 %v315
      %509 = vmatpush1.msra.mxu0 %v315
      %510 = vmatprep.subr.mxu0 0.0
      %511 = vmatpush1.msra.mxu0 0.0
      %512 = vmatprep.subr.mxu0 0.0
      %513 = vmatpush1.msra.mxu0 0.0
      %514 = vmatprep.subr.mxu0 0.0
      %515 = vmatpush1.msra.mxu0 0.0
      %516 = vmatprep.subr.mxu0 0.0
      %517 = vmatpush1.msra.mxu0 0.0
      %518 = vmatprep.subr.mxu0 0.0
      %519 = vmatpush1.msra.mxu0 0.0
      %520 = vmatprep.subr.mxu0 0.0
      %521 = vmatpush1.msra.mxu0 0.0
      %522 = vmatprep.subr.mxu0 0.0
      %523 = vmatpush1.msra.mxu0 0.0
      %524 = vmatprep.subr.mxu0 0.0
      %525 = vmatpush1.msra.mxu0 0.0
      %526 = vmatprep.subr.mxu0 0.0
      %527 = vmatpush1.msra.mxu0 0.0
      %528 = vmatprep.subr.mxu0 0.0
      %529 = vmatpush1.msra.mxu0 0.0
      %530 = vmatprep.subr.mxu0 0.0
      %531 = vmatpush1.msra.mxu0 0.0
      %532 = vmatprep.subr.mxu0 0.0
      %533 = vmatpush1.msra.mxu0 0.0
      %534 = vmatprep.subr.mxu0 0.0
      %535 = vmatpush1.msra.mxu0 0.0
      %536 = vmatprep.subr.mxu0 0.0
      %537 = vmatpush1.msra.mxu0 0.0
      %538 = vmatprep.subr.mxu0 0.0
      %539 = vmatpush1.msra.mxu0 0.0
      %540 = vmatprep.subr.mxu0 0.0
      %541 = vmatpush1.msra.mxu0 0.0
      %542 = vmatprep.subr.mxu0 0.0
      %543 = vmatpush1.msra.mxu0 0.0
      %544 = vmatprep.subr.mxu0 0.0
      %545 = vmatpush1.msra.mxu0 0.0
      %546 = vmatprep.subr.mxu0 0.0
      %547 = vmatpush1.msra.mxu0 0.0
      %548 = vmatprep.subr.mxu0 0.0
      %549 = vmatpush1.msra.mxu0 0.0
      %550 = vmatprep.subr.mxu0 0.0
      %551 = vmatpush1.msra.mxu0 0.0
      %552 = vmatprep.subr.mxu0 0.0
      %553 = vmatpush1.msra.mxu0 0.0
      %554 = vmatprep.subr.mxu0 0.0
      %555 = vmatpush1.msra.mxu0 0.0
      %556 = vmatprep.subr.mxu0 0.0
      %557 = vmatpush1.msra.mxu0 0.0
      %558 = vmatprep.subr.mxu0 0.0
      %559 = vmatpush1.msra.mxu0 0.0
      %560 = vmatprep.subr.mxu0 0.0
      %561 = vmatpush1.msra.mxu0 0.0
      %562 = vmatprep.mubr.f32.mxu0 0.0
      %563 = vmatmul.mubr.f32.gmra.mrb[0].mxu0 %v496
      %v564 = vpop.f32.mrb[0].mxu0
      %v565 = vadd.f32 0.0, %v564
      %v566 = vpop.f32.mrb[0].mxu0
      %v567 = vadd.f32 0.0, %v566
      %568 = vdwg.mxu0
      %569 = vst [vmem:[%s172] sm:$0xff] %v565
      %570 = vst [vmem:[%s172 + $0x8] sm:$0xff] %v567
      %s571 = smul.u32 2, %s14
      %p572 = scmp.lt.s32.totalorder %s571, 3
      %s573 = scalar_select %p572, %s571, 3
      %s574 = smul.addr %s573, 8
      %s575 = scalar_lea.vmem %s3, %s574
      // Predicated region
      $region33: #{act_first_res_block.1} parent=31 // pred_check
        %p576 = pneg %p100
      $region34: #{act_first_res_block.1} parent=31 // pred_check_branch
        %578 = sbr.rel (%p576) target = $region36
      $region35: #{act_first_res_block.1} parent=31 // pred_region
        %s579 = smul.u32 2, %s14
      $region36: #{act_first_res_block.1} parent=31 // pred_fallthru
        _
    $region32: #{act_first_res_block.1} parent=5 // pred_fallthru
      _
    %p580 = scmp.le.s32.totalorder 2, %s9
    // Predicated region
    $region37: #{act_first_res_block.1} parent=5 // pred_check
      %p581 = pneg %p580
    $region38: #{act_first_res_block.1} parent=5 // pred_check_branch
      %583 = sbr.rel (%p581) target = $region40
    $region39: #{act_first_res_block.1} parent=5 // pred_region
      %s584 = ssub.s32 %s9, 2
      // Predicated region
      $region41: #{act_first_res_block.1} parent=39 // pred_check
        %p585 = pneg %p106
      $region42: #{act_first_res_block.1} parent=39 // pred_check_branch
        %587 = sbr.rel (%p585) target = $region44
      $region43: #{act_first_res_block.1} parent=39 // pred_region
        %s588 = smul.u32 2, %s15
        %p589 = scmp.lt.s32.totalorder %s588, 3
        %s590 = scalar_select %p589, %s588, 3
        %s591 = smul.addr %s590, 8
        %s592 = scalar_lea.vmem %s3, %s591
      $region44: #{act_first_res_block.1} parent=39 // pred_fallthru
        _
    $region40: #{act_first_res_block.1} parent=5 // pred_fallthru
      _
  $region6: #{act_first_res_block.1} parent=0 // loop_footer
    %s13 = sadd.s32 1, %s9
  $region7: #{act_first_res_block.1} parent=0 // loop_footer_branch
    %8 = sbr.rel target = $region3
  $region8: #{act_first_res_block.1} parent=0 // loop_exit
    _

</llo_original>
